<compile_context>
chip_gen: v7x
topology: tpu7x:2x2x1
jax: 0.10.0
libtpu: 0.0.40
codegen_flags: <defaults>
</compile_context>

<pallas_src>
import jax
import jax.numpy as jnp
from jax.experimental import pallas as pl
from jax.experimental.pallas import tpu as pltpu

BN_EPS = 1e-5

# Model hyper-parameters (from the PyTorch module defaults).
NUM_DRUG_FP = 167          # DrugEncoder input features
FP_EMBED = 32              # DrugEncoder.dense_fp out features
GENE_EMBED = 256           # CellEncoder.dense_gene out features
ENC_OUT = 64               # both encoders' output size
CAT_DIM = ENC_OUT * 3      # 192, input to fc_1
FC1_HID = CAT_DIM // 2     # 96
FC1_OUT = 64               # fc_1 output (folded away into the tail)
FINAL_OUT = 1              # fc_2 output

VEC_W = 256                # lane width of the packed bias/vector array
NUM_VECS = 9


def _round_up(x, m):
    return ((x + m - 1) // m) * m


# ------------------------------- kernel ------------------------------------

def _comb_kernel(
    d12_ref, c_ref,
    # weight matrices (stored (in, out), bf16)
    d_wfp, d_w1, d_w2,
    c_wg, c_w1, c_w2,
    f_w1a, f_w1b, f_w1c,
    # packed bias / folded vectors, shape (NUM_VECS, VEC_W), f32
    vecs_ref,
    out_ref,
):
    f32 = jnp.float32
    bf16 = jnp.bfloat16
    tb = out_ref.shape[0]

    def vec(row, n):
        # static slice of one packed parameter row -> (1, n)
        return vecs_ref[row:row + 1, 0:n]

    def mm(x, w_ref):
        # bf16 operands, f32 accumulation on the MXU.
        return jnp.dot(x.astype(bf16), w_ref[...], preferred_element_type=f32)

    # ---- drug encoder: both drugs as one stacked (2*TB, 167) pass (pre-stacked in HBM);
    #      BatchNorm already folded into d_w1 / bias row 1 ----
    d = d12_ref[...]
    h = jnp.maximum(mm(d, d_wfp) + vec(0, FP_EMBED), 0.0)          # relu(dense_fp)
    h = jnp.maximum(mm(h, d_w1) + vec(1, FP_EMBED // 2), 0.0)      # relu(BN-folded fc1)
    e12 = mm(h, d_w2) + vec(2, ENC_OUT)                            # fc2 -> (2*TB, 64)
    e1 = e12[:tb]
    e2 = e12[tb:]

    # ---- cell encoder (BatchNorm folded into c_w1 / bias row 4) ----
    g = jnp.maximum(mm(c_ref[...], c_wg) + vec(3, GENE_EMBED), 0.0)
    g = jnp.maximum(mm(g, c_w1) + vec(4, GENE_EMBED // 2), 0.0)
    ec = mm(g, c_w2) + vec(5, ENC_OUT)                             # (TB, 64)

    # ---- fc_1 first layer: BN folded into three K=64 slabs (no lane concat, no BN ops) ----
    s = mm(e1, f_w1a) + mm(e2, f_w1b) + mm(ec, f_w1c) + vec(6, FC1_HID)
    s = jnp.maximum(s, 0.0)                                        # (TB, 96)

    # ---- fc_1 second layer folded with fc_2: out = relu(s) @ (f_w2 @ wo) + (f_b2 @ wo + bo)
    #      done as a VPU multiply + lane reduction (no N=1 MXU push) ----
    out = jnp.sum(s * vec(7, FC1_HID), axis=-1, keepdims=True) + vecs_ref[8:9, 0:1]
    out_ref[...] = out.astype(out_ref.dtype)


# ------------------------- parameter construction --------------------------

def _linear_params(key, fan_in, fan_out):
    """Deterministic, PyTorch-Linear-like init; weight stored as (in, out), bias (out,)."""
    kw, kb = jax.random.split(key)
    bound = 1.0 / (float(fan_in) ** 0.5)
    w = jax.random.uniform(kw, (fan_in, fan_out), jnp.float32, -bound, bound)
    b = jax.random.uniform(kb, (fan_out,), jnp.float32, -bound, bound)
    return w, b


def _bn_params(key, n):
    """BatchNorm1d running stats + affine, folded to (scale, shift), each shape (n,)."""
    kg, kb, km, kv = jax.random.split(key, 4)
    gamma = 1.0 + 0.1 * jax.random.normal(kg, (n,), jnp.float32)
    beta = 0.1 * jax.random.normal(kb, (n,), jnp.float32)
    mean = 0.1 * jax.random.normal(km, (n,), jnp.float32)
    var = 1.0 + 0.1 * jax.random.uniform(kv, (n,), jnp.float32)
    scale = gamma / jnp.sqrt(var + BN_EPS)
    shift = beta - mean * scale
    return scale, shift


def make_params(key, num_genes):
    keys = jax.random.split(key, 12)
    p = {}
    # DrugEncoder (shared for d1 and d2)
    p["d_wfp"], p["d_bfp"] = _linear_params(keys[0], NUM_DRUG_FP, FP_EMBED)
    p["d_bns"], p["d_bnb"] = _bn_params(keys[1], FP_EMBED)
    p["d_w1"], p["d_b1"] = _linear_params(keys[2], FP_EMBED, FP_EMBED // 2)
    p["d_w2"], p["d_b2"] = _linear_params(keys[3], FP_EMBED // 2, ENC_OUT)
    # CellEncoder
    p["c_wg"], p["c_bg"] = _linear_params(keys[4], num_genes, GENE_EMBED)
    p["c_bns"], p["c_bnb"] = _bn_params(keys[5], GENE_EMBED)
    p["c_w1"], p["c_b1"] = _linear_params(keys[6], GENE_EMBED, GENE_EMBED // 2)
    p["c_w2"], p["c_b2"] = _linear_params(keys[7], GENE_EMBED // 2, ENC_OUT)
    # fc_1 (FC2 on concatenated encoder outputs)
    p["f_bns"], p["f_bnb"] = _bn_params(keys[8], CAT_DIM)
    p["f_w1"], p["f_b1"] = _linear_params(keys[9], CAT_DIM, FC1_HID)
    p["f_w2"], p["f_b2"] = _linear_params(keys[10], FC1_HID, FC1_OUT)
    # fc_2
    p["wo"], p["bo"] = _linear_params(keys[11], FC1_OUT, FINAL_OUT)
    return p


def _pack_vectors(vs):
    rows = []
    for v in vs:
        v = jnp.ravel(v).astype(jnp.float32)
        rows.append(jnp.pad(v, (0, VEC_W - v.shape[0])))
    return jnp.stack(rows, axis=0)


def pack_params(p):
    """Fold BN into the next linear, fold fc_2 into fc_1's second layer, split fc_1's first
    weight into 3 K=64 slabs, cast weights to bf16, and pack all small vectors."""
    # BatchNorm (inference) fold:  (x*s + t) @ W + b  ==  x @ (s[:,None]*W) + (t@W + b)
    d_w1 = p["d_bns"][:, None] * p["d_w1"]
    d_b1 = p["d_bnb"] @ p["d_w1"] + p["d_b1"]
    c_w1 = p["c_bns"][:, None] * p["c_w1"]
    c_b1 = p["c_bnb"] @ p["c_w1"] + p["c_b1"]
    f_w1 = p["f_bns"][:, None] * p["f_w1"]
    f_b1 = p["f_bnb"] @ p["f_w1"] + p["f_b1"]
    # fc_1 second layer folded with fc_2 (no activation between them).
    w_tail = (p["f_w2"] @ p["wo"]).reshape(-1)            # (96,)
    b_tail = (p["f_b2"] @ p["wo"] + p["bo"]).reshape(-1)  # (1,)

    weights = tuple(w.astype(jnp.bfloat16) for w in (
        p["d_wfp"], d_w1, p["d_w2"],
        p["c_wg"], c_w1, p["c_w2"],
        f_w1[0:ENC_OUT], f_w1[ENC_OUT:2 * ENC_OUT], f_w1[2 * ENC_OUT:],
    ))
    vec_list = [
        p["d_bfp"], d_b1, p["d_b2"],        # 0-2 : drug encoder biases (BN folded)
        p["c_bg"], c_b1, p["c_b2"],         # 3-5 : cell encoder biases (BN folded)
        f_b1,                               # 6   : fc_1 first-layer bias (BN folded)
        w_tail,                             # 7   : f_w2 @ wo
        b_tail,                             # 8   : f_b2 @ wo + bo
    ]
    assert len(vec_list) == NUM_VECS
    vecs = _pack_vectors(vec_list)          # f32 (9, 256)
    return weights, vecs


# ------------------------------ entry point ---------------------------------

def comb_forward(d1, d2, c_, params, tb=None):
    B = d1.shape[0]
    num_genes = c_.shape[1]
    weights, vecs = pack_params(params)

    # Per-generation VMEM budget (~75% of capacity); conservative fallback.
    try:
        vmem_cap = int(pltpu.get_tpu_info().vmem_capacity_bytes)
    except Exception:
        vmem_cap = 64 * 1024 * 1024
    vmem_budget = int(0.75 * vmem_cap)

    # Larger batch tile where VMEM allows (v5e/v6e: 128 MiB); keep 512 on v7x (64 MiB).
    if tb is None:
        tb = 1024 if vmem_cap > (96 << 20) else 512

    # Batch tile: multiple of 8 sublanes; cap so there are >= 2 grid steps whenever B allows,
    # letting dimension_semantics=("parallel",) shard the batch across v7x's two TensorCores.
    TB = min(_round_up(tb, 8), _round_up(B, 8))
    TB = min(TB, max(8, _round_up(pl.cdiv(B, 2), 8)))
    nb = pl.cdiv(B, TB)
    Bp = nb * TB

    # Pre-stack d1/d2 per tile (tile i = its TB d1 rows followed by its TB d2 rows) so the
    # kernel needs no sublane concat; cast inputs to bf16 in HBM (fingerprints are exact).
    def pad_rows(x):
        return x if Bp == B else jnp.pad(x, ((0, Bp - B), (0, 0)))

    d1p = pad_rows(d1).astype(jnp.bfloat16).reshape(nb, TB, NUM_DRUG_FP)
    d2p = pad_rows(d2).astype(jnp.bfloat16).reshape(nb, TB, NUM_DRUG_FP)
    d12 = jnp.concatenate([d1p, d2p], axis=1).reshape(nb * 2 * TB, NUM_DRUG_FP)
    cp = pad_rows(c_).astype(jnp.bfloat16)

    def const_spec(arr):
        nd = arr.ndim
        # Weights stay resident via a constant index map.
        # TODO(synk): use pipeline_mode=pl.Buffered(1) to guarantee single-buffering of the
        # grid-invariant weights (c_wg can be multi-MB for real gene panels).
        return pl.BlockSpec(arr.shape, lambda i: (0,) * nd)

    # TODO(synk): consider pipeline_mode=pl.Buffered(3) on the gene stream and a lane-dense
    # (1, TB) output layout if bundle dumps show exposed DMA / vst pressure.
    in_specs = ([pl.BlockSpec((2 * TB, NUM_DRUG_FP), lambda i: (i, 0)),
                 pl.BlockSpec((TB, num_genes), lambda i: (i, 0))]
                + [const_spec(w) for w in weights]
                + [const_spec(vecs)])

    # Advisory cost estimate for the XLA scheduler.
    flops = 2 * B * (
        2 * (NUM_DRUG_FP * FP_EMBED + FP_EMBED * (FP_EMBED // 2) + (FP_EMBED // 2) * ENC_OUT)
        + num_genes * GENE_EMBED + GENE_EMBED * (GENE_EMBED // 2) + (GENE_EMBED // 2) * ENC_OUT
        + CAT_DIM * FC1_HID + FC1_HID * FINAL_OUT)
    param_bytes = sum(int(w.size) for w in weights) * 2 + int(vecs.size) * 4
    bytes_accessed = 2 * Bp * (2 * NUM_DRUG_FP + num_genes) + 4 * Bp + param_bytes

    # Double-buffered bf16 input tiles + (double-buffered) resident params + f32 temps.
    in_tile_bytes = (2 * TB * NUM_DRUG_FP + TB * num_genes) * 2
    interm_bytes = TB * 4096
    vmem_limit = min(vmem_budget,
                     max(32 << 20,
                         4 * in_tile_bytes + 2 * param_bytes + interm_bytes + (8 << 20)))

    out = pl.pallas_call(
        _comb_kernel,
        out_shape=jax.ShapeDtypeStruct((Bp, FINAL_OUT), jnp.float32),
        grid=(nb,),
        in_specs=in_specs,
        out_specs=pl.BlockSpec((TB, FINAL_OUT), lambda i: (i, 0)),
        compiler_params=pltpu.CompilerParams(
            dimension_semantics=("parallel",),
            vmem_limit_bytes=int(vmem_limit)),
        cost_estimate=pl.CostEstimate(
            flops=int(flops), transcendentals=0, bytes_accessed=int(bytes_accessed)),
    )(d12, cp, *weights, vecs)
    return out[:B] if Bp != B else out


# ------------------------------ reference -----------------------------------

def comb_reference(d1, d2, c_, p):
    """Pure-JAX f32 reference following the original (unfused) module structure."""
    def fc2(x, bns, bnb, w1, b1, w2, b2):
        x = x * bns + bnb
        x = jnp.maximum(x @ w1 + b1, 0.0)
        return x @ w2 + b2

    def drug(x):
        h = jnp.maximum(x @ p["d_wfp"] + p["d_bfp"], 0.0)
        return fc2(h, p["d_bns"], p["d_bnb"], p["d_w1"], p["d_b1"], p["d_w2"], p["d_b2"])

    def cell(x):
        h = jnp.maximum(x @ p["c_wg"] + p["c_bg"], 0.0)
        return fc2(h, p["c_bns"], p["c_bnb"], p["c_w1"], p["c_b1"], p["c_w2"], p["c_b2"])

    cat = jnp.concatenate([drug(d1), drug(d2), cell(c_)], axis=1)
    h = fc2(cat, p["f_bns"], p["f_bnb"], p["f_w1"], p["f_b1"], p["f_w2"], p["f_b2"])
    return h @ p["wo"] + p["bo"]


if __name__ == "__main__":
    B = 8
    NUM_GENES = 32

    key = jax.random.PRNGKey(0)
    k_d1, k_d2, k_c, k_params = jax.random.split(key, 4)

    # Drug fingerprints are binary (exact in bf16); gene expression is continuous.
    d1 = jax.random.bernoulli(k_d1, 0.5, (B, NUM_DRUG_FP)).astype(jnp.float32)
    d2 = jax.random.bernoulli(k_d2, 0.5, (B, NUM_DRUG_FP)).astype(jnp.float32)
    c_ = jax.random.normal(k_c, (B, NUM_GENES), jnp.float32)
    params = make_params(k_params, NUM_GENES)

    out = comb_forward(d1, d2, c_, params)
    out = jax.block_until_ready(out)

    ref = comb_reference(d1, d2, c_, params)
    assert out.shape == (B, FINAL_OUT), out.shape
    max_diff = float(jnp.max(jnp.abs(out - ref)))
    # bf16 matmul operands (f32 accumulation) + offline BN / fc_2 folds -> relaxed tolerance
    # vs. the pure-f32 unfused reference.
    assert jnp.allclose(out, ref, rtol=3e-2, atol=3e-2), f"max abs diff {max_diff}"

    print("KERNEL_OK")
</pallas_src>

<mosaic_0001>
module attributes {stable_mosaic.version = 11 : i64} {
  func.func @_comb_kernel(%arg0: i32, %arg1: memref<16x167xbf16, #tpu.memory_space<vmem>>, %arg2: memref<8x32xbf16, #tpu.memory_space<vmem>>, %arg3: memref<167x32xbf16, #tpu.memory_space<vmem>>, %arg4: memref<32x16xbf16, #tpu.memory_space<vmem>>, %arg5: memref<16x64xbf16, #tpu.memory_space<vmem>>, %arg6: memref<32x256xbf16, #tpu.memory_space<vmem>>, %arg7: memref<256x128xbf16, #tpu.memory_space<vmem>>, %arg8: memref<128x64xbf16, #tpu.memory_space<vmem>>, %arg9: memref<64x96xbf16, #tpu.memory_space<vmem>>, %arg10: memref<64x96xbf16, #tpu.memory_space<vmem>>, %arg11: memref<64x96xbf16, #tpu.memory_space<vmem>>, %arg12: memref<9x256xf32, #tpu.memory_space<vmem>>, %arg13: memref<8x1xf32, #tpu.memory_space<vmem>>) attributes {dimension_semantics = [#tpu.dimension_semantics<parallel>], iteration_bounds = array<i64: 1>, scalar_prefetch = 0 : i64, scratch_operands = 0 : i64, tpu.core_type = #tpu.core_type<tc>, window_params = [{transform_indices = @transform_0, window_bounds = array<i64: 16, 167>}, {transform_indices = @transform_1, window_bounds = array<i64: 8, 32>}, {pipeline_mode = #tpu.pipeline_mode<synchronous>, transform_indices = @transform_2, window_bounds = array<i64: 167, 32>}, {pipeline_mode = #tpu.pipeline_mode<synchronous>, transform_indices = @transform_3, window_bounds = array<i64: 32, 16>}, {pipeline_mode = #tpu.pipeline_mode<synchronous>, transform_indices = @transform_4, window_bounds = array<i64: 16, 64>}, {pipeline_mode = #tpu.pipeline_mode<synchronous>, transform_indices = @transform_5, window_bounds = array<i64: 32, 256>}, {pipeline_mode = #tpu.pipeline_mode<synchronous>, transform_indices = @transform_6, window_bounds = array<i64: 256, 128>}, {pipeline_mode = #tpu.pipeline_mode<synchronous>, transform_indices = @transform_7, window_bounds = array<i64: 128, 64>}, {pipeline_mode = #tpu.pipeline_mode<synchronous>, transform_indices = @transform_8, window_bounds = array<i64: 64, 96>}, {pipeline_mode = #tpu.pipeline_mode<synchronous>, transform_indices = @transform_9, window_bounds = array<i64: 64, 96>}, {pipeline_mode = #tpu.pipeline_mode<synchronous>, transform_indices = @transform_10, window_bounds = array<i64: 64, 96>}, {pipeline_mode = #tpu.pipeline_mode<synchronous>, transform_indices = @transform_11, window_bounds = array<i64: 9, 256>}, {transform_indices = @transform_12, window_bounds = array<i64: 8, 1>}]} {
    %c0 = arith.constant 0 : index
    %c0_0 = arith.constant 0 : index
    %0 = vector.load %arg1[%c0, %c0_0] : memref<16x167xbf16, #tpu.memory_space<vmem>>, vector<16x167xbf16>
    %c0_1 = arith.constant 0 : index
    %c0_2 = arith.constant 0 : index
    %1 = vector.load %arg3[%c0_1, %c0_2] : memref<167x32xbf16, #tpu.memory_space<vmem>>, vector<167x32xbf16>
    %cst = arith.constant dense<0.000000e+00> : vector<16x32xf32>
    %2 = tpu.matmul %0, %1, %cst {dimension_numbers = #tpu.dot_dimension_numbers<[1], [0], [0], [1], [0, 0, 1, 1], [], []>} : vector<16x167xbf16>, vector<167x32xbf16>, vector<16x32xf32> -> vector<16x32xf32>
    %c0_3 = arith.constant 0 : index
    %c0_4 = arith.constant 0 : index
    %3 = vector.load %arg12[%c0_3, %c0_4] : memref<9x256xf32, #tpu.memory_space<vmem>>, vector<1x32xf32>
    %4 = vector.broadcast %3 : vector<1x32xf32> to vector<16x32xf32>
    %5 = arith.addf %2, %4 : vector<16x32xf32>
    %cst_5 = arith.constant 0.000000e+00 : f32
    %6 = vector.broadcast %cst_5 : f32 to vector<16x32xf32>
    %7 = arith.maximumf %5, %6 : vector<16x32xf32>
    %8 = arith.truncf %7 : vector<16x32xf32> to vector<16x32xbf16>
    %c0_6 = arith.constant 0 : index
    %c0_7 = arith.constant 0 : index
    %9 = vector.load %arg4[%c0_6, %c0_7] : memref<32x16xbf16, #tpu.memory_space<vmem>>, vector<32x16xbf16>
    %cst_8 = arith.constant dense<0.000000e+00> : vector<16x16xf32>
    %10 = tpu.matmul %8, %9, %cst_8 {dimension_numbers = #tpu.dot_dimension_numbers<[1], [0], [0], [1], [0, 0, 1, 1], [], []>} : vector<16x32xbf16>, vector<32x16xbf16>, vector<16x16xf32> -> vector<16x16xf32>
    %c1 = arith.constant 1 : index
    %c0_9 = arith.constant 0 : index
    %11 = vector.load %arg12[%c1, %c0_9] : memref<9x256xf32, #tpu.memory_space<vmem>>, vector<1x16xf32>
    %12 = vector.broadcast %11 : vector<1x16xf32> to vector<16x16xf32>
    %13 = arith.addf %10, %12 : vector<16x16xf32>
    %cst_10 = arith.constant 0.000000e+00 : f32
    %14 = vector.broadcast %cst_10 : f32 to vector<16x16xf32>
    %15 = arith.maximumf %13, %14 : vector<16x16xf32>
    %16 = arith.truncf %15 : vector<16x16xf32> to vector<16x16xbf16>
    %c0_11 = arith.constant 0 : index
    %c0_12 = arith.constant 0 : index
    %17 = vector.load %arg5[%c0_11, %c0_12] : memref<16x64xbf16, #tpu.memory_space<vmem>>, vector<16x64xbf16>
    %cst_13 = arith.constant dense<0.000000e+00> : vector<16x64xf32>
    %18 = tpu.matmul %16, %17, %cst_13 {dimension_numbers = #tpu.dot_dimension_numbers<[1], [0], [0], [1], [0, 0, 1, 1], [], []>} : vector<16x16xbf16>, vector<16x64xbf16>, vector<16x64xf32> -> vector<16x64xf32>
    %c2 = arith.constant 2 : index
    %c0_14 = arith.constant 0 : index
    %19 = vector.load %arg12[%c2, %c0_14] : memref<9x256xf32, #tpu.memory_space<vmem>>, vector<1x64xf32>
    %20 = vector.broadcast %19 : vector<1x64xf32> to vector<16x64xf32>
    %21 = arith.addf %18, %20 : vector<16x64xf32>
    %22 = vector.extract_strided_slice %21 {offsets = [0, 0], sizes = [8, 64], strides = [1, 1]} : vector<16x64xf32> to vector<8x64xf32>
    %23 = vector.extract_strided_slice %21 {offsets = [8, 0], sizes = [8, 64], strides = [1, 1]} : vector<16x64xf32> to vector<8x64xf32>
    %c0_15 = arith.constant 0 : index
    %c0_16 = arith.constant 0 : index
    %24 = vector.load %arg2[%c0_15, %c0_16] : memref<8x32xbf16, #tpu.memory_space<vmem>>, vector<8x32xbf16>
    %c0_17 = arith.constant 0 : index
    %c0_18 = arith.constant 0 : index
    %25 = vector.load %arg6[%c0_17, %c0_18] : memref<32x256xbf16, #tpu.memory_space<vmem>>, vector<32x256xbf16>
    %cst_19 = arith.constant dense<0.000000e+00> : vector<8x256xf32>
    %26 = tpu.matmul %24, %25, %cst_19 {dimension_numbers = #tpu.dot_dimension_numbers<[1], [0], [0], [1], [0, 0, 1, 1], [], []>} : vector<8x32xbf16>, vector<32x256xbf16>, vector<8x256xf32> -> vector<8x256xf32>
    %c3 = arith.constant 3 : index
    %c0_20 = arith.constant 0 : index
    %27 = vector.load %arg12[%c3, %c0_20] : memref<9x256xf32, #tpu.memory_space<vmem>>, vector<1x256xf32>
    %28 = vector.broadcast %27 : vector<1x256xf32> to vector<8x256xf32>
    %29 = arith.addf %26, %28 : vector<8x256xf32>
    %cst_21 = arith.constant 0.000000e+00 : f32
    %30 = vector.broadcast %cst_21 : f32 to vector<8x256xf32>
    %31 = arith.maximumf %29, %30 : vector<8x256xf32>
    %32 = arith.truncf %31 : vector<8x256xf32> to vector<8x256xbf16>
    %c0_22 = arith.constant 0 : index
    %c0_23 = arith.constant 0 : index
    %33 = vector.load %arg7[%c0_22, %c0_23] : memref<256x128xbf16, #tpu.memory_space<vmem>>, vector<256x128xbf16>
    %cst_24 = arith.constant dense<0.000000e+00> : vector<8x128xf32>
    %34 = tpu.matmul %32, %33, %cst_24 {dimension_numbers = #tpu.dot_dimension_numbers<[1], [0], [0], [1], [0, 0, 1, 1], [], []>} : vector<8x256xbf16>, vector<256x128xbf16>, vector<8x128xf32> -> vector<8x128xf32>
    %c4 = arith.constant 4 : index
    %c0_25 = arith.constant 0 : index
    %35 = vector.load %arg12[%c4, %c0_25] : memref<9x256xf32, #tpu.memory_space<vmem>>, vector<1x128xf32>
    %36 = vector.broadcast %35 : vector<1x128xf32> to vector<8x128xf32>
    %37 = arith.addf %34, %36 : vector<8x128xf32>
    %cst_26 = arith.constant 0.000000e+00 : f32
    %38 = vector.broadcast %cst_26 : f32 to vector<8x128xf32>
    %39 = arith.maximumf %37, %38 : vector<8x128xf32>
    %40 = arith.truncf %39 : vector<8x128xf32> to vector<8x128xbf16>
    %c0_27 = arith.constant 0 : index
    %c0_28 = arith.constant 0 : index
    %41 = vector.load %arg8[%c0_27, %c0_28] : memref<128x64xbf16, #tpu.memory_space<vmem>>, vector<128x64xbf16>
    %cst_29 = arith.constant dense<0.000000e+00> : vector<8x64xf32>
    %42 = tpu.matmul %40, %41, %cst_29 {dimension_numbers = #tpu.dot_dimension_numbers<[1], [0], [0], [1], [0, 0, 1, 1], [], []>} : vector<8x128xbf16>, vector<128x64xbf16>, vector<8x64xf32> -> vector<8x64xf32>
    %c5 = arith.constant 5 : index
    %c0_30 = arith.constant 0 : index
    %43 = vector.load %arg12[%c5, %c0_30] : memref<9x256xf32, #tpu.memory_space<vmem>>, vector<1x64xf32>
    %44 = vector.broadcast %43 : vector<1x64xf32> to vector<8x64xf32>
    %45 = arith.addf %42, %44 : vector<8x64xf32>
    %46 = arith.truncf %22 : vector<8x64xf32> to vector<8x64xbf16>
    %c0_31 = arith.constant 0 : index
    %c0_32 = arith.constant 0 : index
    %47 = vector.load %arg9[%c0_31, %c0_32] : memref<64x96xbf16, #tpu.memory_space<vmem>>, vector<64x96xbf16>
    %cst_33 = arith.constant dense<0.000000e+00> : vector<8x96xf32>
    %48 = tpu.matmul %46, %47, %cst_33 {dimension_numbers = #tpu.dot_dimension_numbers<[1], [0], [0], [1], [0, 0, 1, 1], [], []>} : vector<8x64xbf16>, vector<64x96xbf16>, vector<8x96xf32> -> vector<8x96xf32>
    %49 = arith.truncf %23 : vector<8x64xf32> to vector<8x64xbf16>
    %c0_34 = arith.constant 0 : index
    %c0_35 = arith.constant 0 : index
    %50 = vector.load %arg10[%c0_34, %c0_35] : memref<64x96xbf16, #tpu.memory_space<vmem>>, vector<64x96xbf16>
    %cst_36 = arith.constant dense<0.000000e+00> : vector<8x96xf32>
    %51 = tpu.matmul %49, %50, %cst_36 {dimension_numbers = #tpu.dot_dimension_numbers<[1], [0], [0], [1], [0, 0, 1, 1], [], []>} : vector<8x64xbf16>, vector<64x96xbf16>, vector<8x96xf32> -> vector<8x96xf32>
    %52 = arith.addf %48, %51 : vector<8x96xf32>
    %53 = arith.truncf %45 : vector<8x64xf32> to vector<8x64xbf16>
    %c0_37 = arith.constant 0 : index
    %c0_38 = arith.constant 0 : index
    %54 = vector.load %arg11[%c0_37, %c0_38] : memref<64x96xbf16, #tpu.memory_space<vmem>>, vector<64x96xbf16>
    %cst_39 = arith.constant dense<0.000000e+00> : vector<8x96xf32>
    %55 = tpu.matmul %53, %54, %cst_39 {dimension_numbers = #tpu.dot_dimension_numbers<[1], [0], [0], [1], [0, 0, 1, 1], [], []>} : vector<8x64xbf16>, vector<64x96xbf16>, vector<8x96xf32> -> vector<8x96xf32>
    %56 = arith.addf %52, %55 : vector<8x96xf32>
    %c6 = arith.constant 6 : index
    %c0_40 = arith.constant 0 : index
    %57 = vector.load %arg12[%c6, %c0_40] : memref<9x256xf32, #tpu.memory_space<vmem>>, vector<1x96xf32>
    %58 = vector.broadcast %57 : vector<1x96xf32> to vector<8x96xf32>
    %59 = arith.addf %56, %58 : vector<8x96xf32>
    %cst_41 = arith.constant 0.000000e+00 : f32
    %60 = vector.broadcast %cst_41 : f32 to vector<8x96xf32>
    %61 = arith.maximumf %59, %60 : vector<8x96xf32>
    %c7 = arith.constant 7 : index
    %c0_42 = arith.constant 0 : index
    %62 = vector.load %arg12[%c7, %c0_42] : memref<9x256xf32, #tpu.memory_space<vmem>>, vector<1x96xf32>
    %63 = vector.broadcast %62 : vector<1x96xf32> to vector<8x96xf32>
    %64 = arith.mulf %61, %63 : vector<8x96xf32>
    %cst_43 = arith.constant dense<0.000000e+00> : vector<8xf32>
    %65 = vector.multi_reduction <add>, %64, %cst_43 [1] : vector<8x96xf32> to vector<8xf32>
    %66 = vector.shape_cast %65 : vector<8xf32> to vector<8x1xf32>
    %c8 = arith.constant 8 : index
    %c0_44 = arith.constant 0 : index
    %67 = vector.load %arg12[%c8, %c0_44] : memref<9x256xf32, #tpu.memory_space<vmem>>, vector<1x1xf32>
    %68 = vector.broadcast %67 : vector<1x1xf32> to vector<8x1xf32>
    %69 = arith.addf %66, %68 : vector<8x1xf32>
    %c0_45 = arith.constant 0 : index
    %c0_46 = arith.constant 0 : index
    %70 = vector.load %arg13[%c0_45, %c0_46] : memref<8x1xf32, #tpu.memory_space<vmem>>, vector<8x1xf32>
    tpu.vector_store %arg13[%c0_45, %c0_46], %69 {strides = array<i32>} : memref<8x1xf32, #tpu.memory_space<vmem>>, vector<8x1xf32>,
    return
  }
  func.func @transform_0(%arg0: i32) -> (i32, i32) {
    %c0_i32 = arith.constant 0 : i32
    %c0_i32_0 = arith.constant 0 : i32
    return %arg0, %c0_i32 : i32, i32
  }
  func.func @transform_1(%arg0: i32) -> (i32, i32) {
    %c0_i32 = arith.constant 0 : i32
    %c0_i32_0 = arith.constant 0 : i32
    return %arg0, %c0_i32 : i32, i32
  }
  func.func @transform_2(%arg0: i32) -> (i32, i32) {
    %c0_i32 = arith.constant 0 : i32
    %c0_i32_0 = arith.constant 0 : i32
    %c0_i32_1 = arith.constant 0 : i32
    return %c0_i32, %c0_i32_0 : i32, i32
  }
  func.func @transform_3(%arg0: i32) -> (i32, i32) {
    %c0_i32 = arith.constant 0 : i32
    %c0_i32_0 = arith.constant 0 : i32
    %c0_i32_1 = arith.constant 0 : i32
    return %c0_i32, %c0_i32_0 : i32, i32
  }
  func.func @transform_4(%arg0: i32) -> (i32, i32) {
    %c0_i32 = arith.constant 0 : i32
    %c0_i32_0 = arith.constant 0 : i32
    %c0_i32_1 = arith.constant 0 : i32
    return %c0_i32, %c0_i32_0 : i32, i32
  }
  func.func @transform_5(%arg0: i32) -> (i32, i32) {
    %c0_i32 = arith.constant 0 : i32
    %c0_i32_0 = arith.constant 0 : i32
    %c0_i32_1 = arith.constant 0 : i32
    return %c0_i32, %c0_i32_0 : i32, i32
  }
  func.func @transform_6(%arg0: i32) -> (i32, i32) {
    %c0_i32 = arith.constant 0 : i32
    %c0_i32_0 = arith.constant 0 : i32
    %c0_i32_1 = arith.constant 0 : i32
    return %c0_i32, %c0_i32_0 : i32, i32
  }
  func.func @transform_7(%arg0: i32) -> (i32, i32) {
    %c0_i32 = arith.constant 0 : i32
    %c0_i32_0 = arith.constant 0 : i32
    %c0_i32_1 = arith.constant 0 : i32
    return %c0_i32, %c0_i32_0 : i32, i32
  }
  func.func @transform_8(%arg0: i32) -> (i32, i32) {
    %c0_i32 = arith.constant 0 : i32
    %c0_i32_0 = arith.constant 0 : i32
    %c0_i32_1 = arith.constant 0 : i32
    return %c0_i32, %c0_i32_0 : i32, i32
  }
  func.func @transform_9(%arg0: i32) -> (i32, i32) {
    %c0_i32 = arith.constant 0 : i32
    %c0_i32_0 = arith.constant 0 : i32
    %c0_i32_1 = arith.constant 0 : i32
    return %c0_i32, %c0_i32_0 : i32, i32
  }
  func.func @transform_10(%arg0: i32) -> (i32, i32) {
    %c0_i32 = arith.constant 0 : i32
    %c0_i32_0 = arith.constant 0 : i32
    %c0_i32_1 = arith.constant 0 : i32
    return %c0_i32, %c0_i32_0 : i32, i32
  }
  func.func @transform_11(%arg0: i32) -> (i32, i32) {
    %c0_i32 = arith.constant 0 : i32
    %c0_i32_0 = arith.constant 0 : i32
    %c0_i32_1 = arith.constant 0 : i32
    return %c0_i32, %c0_i32_0 : i32, i32
  }
  func.func @transform_12(%arg0: i32) -> (i32, i32) {
    %c0_i32 = arith.constant 0 : i32
    %c0_i32_0 = arith.constant 0 : i32
    return %arg0, %c0_i32 : i32, i32
  }
}

</mosaic_0001>

<llo_original>
// kernel: tpu_custom_call.1
$region0: #{tpu_custom_call.1}
  #allocation0 [shape = 'u32[]', space=smem, size = 0x4, offset = 0x4, fixed_abs, tag = 'smem constant byte address 0x4 - core index']
  #allocation1 [shape = 'u32[144,128]{1,0:T(1,128)}', space=vmem, size = 0x12000, scoped, tag = 'internal scratch']
  %s0 = inlined_call_operand.hbm [shape: bf16[16,167], index: 0, kind: input, shape index: {}]
  %s1 = inlined_call_operand.vmem [shape: bf16[8,32], index: 1, kind: input, shape index: {}]
  %s2 = inlined_call_operand.vmem [shape: bf16[167,32], index: 2, kind: input, shape index: {}]
  %s3 = inlined_call_operand.vmem [shape: bf16[32,16], index: 3, kind: input, shape index: {}]
  %s4 = inlined_call_operand.hbm [shape: bf16[16,64], index: 4, kind: input, shape index: {}]
  %s5 = inlined_call_operand.vmem [shape: bf16[32,256], index: 5, kind: input, shape index: {}]
  %s6 = inlined_call_operand.vmem [shape: bf16[256,128], index: 6, kind: input, shape index: {}]
  %s7 = inlined_call_operand.vmem [shape: bf16[128,64], index: 7, kind: input, shape index: {}]
  %s8 = inlined_call_operand.vmem [shape: bf16[64,96], index: 8, kind: input, shape index: {}]
  %s9 = inlined_call_operand.vmem [shape: bf16[64,96], index: 9, kind: input, shape index: {}]
  %s10 = inlined_call_operand.hbm [shape: bf16[64,96], index: 10, kind: input, shape index: {}]
  %s11 = inlined_call_operand.hbm [shape: f32[9,256], index: 11, kind: input, shape index: {}]
  %s12 = inlined_call_operand.vmem [shape: f32[8,1], index: 12, kind: output, shape index: {}]
  %s13 = sld [smem:[#allocation0]]
  $region74: #{tpu_custom_call.1} parent=0
    _
  %s15 = ssub.s32 1, %s13
  %s16 = scalar_select 0, %s15, %s13
  $region1: #{tpu_custom_call.1} parent=0
    #allocation2 [shape = 'u8[8192]{0}', space=vmem, size = 0x2000, scoped, tag = 'input window, operand 0, single buffered']
    #allocation3 [shape = 's32[1]{0}', space=sflag, size = 0x4, scoped, tag = 'scoped memory for tpu_custom_call.1']
    #allocation4 [shape = 'u8[4096]{0}', space=vmem, size = 0x1000, scoped, tag = 'input window, operand 4, single buffered']
    #allocation5 [shape = 's32[1]{0}', space=sflag, size = 0x4, scoped, tag = 'scoped memory for tpu_custom_call.1']
    #allocation6 [shape = 'u8[16384]{0}', space=vmem, size = 0x4000, scoped, tag = 'input window, operand 10, single buffered']
    #allocation7 [shape = 'u8[16384]{0}', space=vmem, size = 0x4000, scoped, tag = 'input window, operand 11, single buffered']
    #allocation8 [shape = 's32[1]{0}', space=sflag, size = 0x4, scoped, tag = 'scoped memory for tpu_custom_call.1']
    %17 = vsyncpa [#allocation3], 0
    %18 = vsyncpa [#allocation5], 0
    %19 = vsyncpa [#allocation8], 0
    // Predicated region
    $region2: #{tpu_custom_call.1} parent=1 // pred_check
      _
    $region3: #{tpu_custom_call.1} parent=1 // pred_check_branch
      %21 = sbr.rel (0) target = $region5
    $region4: #{tpu_custom_call.1} parent=1 // pred_region
      %s23 = ssub.s32 256, 256
      %24 = vsyncadd [#allocation3], %s23
      %s25 = sshll.u32 [#allocation2], 4
      %s26 = int_to_ptr.vmem [resolvable:$true] %s25
      %31 = dma.hbm_to_vmem [thread:$0]  %s0, 256, %s26, [#allocation3], 128, 128, 8
    $region5: #{tpu_custom_call.1} parent=1 // pred_fallthru
      _
    // Predicated region
    $region6: #{tpu_custom_call.1} parent=1 // pred_check
      _
    $region7: #{tpu_custom_call.1} parent=1 // pred_check_branch
      %33 = sbr.rel (0) target = $region9
    $region8: #{tpu_custom_call.1} parent=1 // pred_region
      _
    $region9: #{tpu_custom_call.1} parent=1 // pred_fallthru
      _
    // Predicated region
    $region10: #{tpu_custom_call.1} parent=1 // pred_check
      _
    $region11: #{tpu_custom_call.1} parent=1 // pred_check_branch
      %35 = sbr.rel (0) target = $region13
    $region12: #{tpu_custom_call.1} parent=1 // pred_region
      _
    $region13: #{tpu_custom_call.1} parent=1 // pred_fallthru
      _
    // Predicated region
    $region14: #{tpu_custom_call.1} parent=1 // pred_check
      _
    $region15: #{tpu_custom_call.1} parent=1 // pred_check_branch
      %37 = sbr.rel (0) target = $region17
    $region16: #{tpu_custom_call.1} parent=1 // pred_region
      _
    $region17: #{tpu_custom_call.1} parent=1 // pred_fallthru
      _
    // Predicated region
    $region18: #{tpu_custom_call.1} parent=1 // pred_check
      _
    $region19: #{tpu_custom_call.1} parent=1 // pred_check_branch
      %39 = sbr.rel (0) target = $region21
    $region20: #{tpu_custom_call.1} parent=1 // pred_region
      %s41 = ssub.s32 128, 128
      %42 = vsyncadd [#allocation5], %s41
      %s43 = sshll.u32 [#allocation4], 4
      %s44 = int_to_ptr.vmem [resolvable:$true] %s43
      %49 = dma.hbm_to_vmem [thread:$0]  %s4, 128, %s44, [#allocation5], 64, 64, 4
    $region21: #{tpu_custom_call.1} parent=1 // pred_fallthru
      _
    // Predicated region
    $region22: #{tpu_custom_call.1} parent=1 // pred_check
      _
    $region23: #{tpu_custom_call.1} parent=1 // pred_check_branch
      %51 = sbr.rel (0) target = $region25
    $region24: #{tpu_custom_call.1} parent=1 // pred_region
      _
    $region25: #{tpu_custom_call.1} parent=1 // pred_fallthru
      _
    // Predicated region
    $region26: #{tpu_custom_call.1} parent=1 // pred_check
      _
    $region27: #{tpu_custom_call.1} parent=1 // pred_check_branch
      %53 = sbr.rel (0) target = $region29
    $region28: #{tpu_custom_call.1} parent=1 // pred_region
      _
    $region29: #{tpu_custom_call.1} parent=1 // pred_fallthru
      _
    // Predicated region
    $region30: #{tpu_custom_call.1} parent=1 // pred_check
      _
    $region31: #{tpu_custom_call.1} parent=1 // pred_check_branch
      %55 = sbr.rel (0) target = $region33
    $region32: #{tpu_custom_call.1} parent=1 // pred_region
      _
    $region33: #{tpu_custom_call.1} parent=1 // pred_fallthru
      _
    // Predicated region
    $region34: #{tpu_custom_call.1} parent=1 // pred_check
      _
    $region35: #{tpu_custom_call.1} parent=1 // pred_check_branch
      %57 = sbr.rel (0) target = $region37
    $region36: #{tpu_custom_call.1} parent=1 // pred_region
      _
    $region37: #{tpu_custom_call.1} parent=1 // pred_fallthru
      _
    // Predicated region
    $region38: #{tpu_custom_call.1} parent=1 // pred_check
      _
    $region39: #{tpu_custom_call.1} parent=1 // pred_check_branch
      %59 = sbr.rel (0) target = $region41
    $region40: #{tpu_custom_call.1} parent=1 // pred_region
      _
    $region41: #{tpu_custom_call.1} parent=1 // pred_fallthru
      _
    // Predicated region
    $region42: #{tpu_custom_call.1} parent=1 // pred_check
      _
    $region43: #{tpu_custom_call.1} parent=1 // pred_check_branch
      %61 = sbr.rel (0) target = $region45
    $region44: #{tpu_custom_call.1} parent=1 // pred_region
      %s63 = ssub.s32 512, 512
      %64 = vsyncadd [#allocation5], %s63
      %s65 = sshll.u32 [#allocation6], 4
      %s66 = int_to_ptr.vmem [resolvable:$true] %s65
      %71 = dma.hbm_to_vmem [thread:$0]  %s10, 512, %s66, [#allocation5], 64, 64, 4
    $region45: #{tpu_custom_call.1} parent=1 // pred_fallthru
      _
    // Predicated region
    $region46: #{tpu_custom_call.1} parent=1 // pred_check
      _
    $region47: #{tpu_custom_call.1} parent=1 // pred_check_branch
      %73 = sbr.rel (0) target = $region49
    $region48: #{tpu_custom_call.1} parent=1 // pred_region
      %s75 = ssub.s32 512, 512
      %76 = vsyncadd [#allocation8], %s75
      %s77 = sshll.u32 [#allocation7], 4
      %s78 = int_to_ptr.vmem [resolvable:$true] %s77
      %83 = dma.hbm_to_vmem [thread:$0]  %s11, 512, %s78, [#allocation8], 256, 256, 16
    $region49: #{tpu_custom_call.1} parent=1 // pred_fallthru
      _
    // Predicated region
    $region50: #{tpu_custom_call.1} parent=1 // pred_check
      _
    $region51: #{tpu_custom_call.1} parent=1 // pred_check_branch
      %85 = sbr.rel (0) target = $region53
    $region52: #{tpu_custom_call.1} parent=1 // pred_region
      %86 = dma.done [#allocation3], 256
    $region53: #{tpu_custom_call.1} parent=1 // pred_fallthru
      _
    // Predicated region
    $region54: #{tpu_custom_call.1} parent=1 // pred_check
      _
    $region55: #{tpu_custom_call.1} parent=1 // pred_check_branch
      %88 = sbr.rel (0) target = $region57
    $region56: #{tpu_custom_call.1} parent=1 // pred_region
      %89 = dma.done [#allocation5], 128
    $region57: #{tpu_custom_call.1} parent=1 // pred_fallthru
      _
    // Predicated region
    $region58: #{tpu_custom_call.1} parent=1 // pred_check
      _
    $region59: #{tpu_custom_call.1} parent=1 // pred_check_branch
      %91 = sbr.rel (0) target = $region61
    $region60: #{tpu_custom_call.1} parent=1 // pred_region
      %92 = dma.done [#allocation5], 512
    $region61: #{tpu_custom_call.1} parent=1 // pred_fallthru
      _
    // Predicated region
    $region62: #{tpu_custom_call.1} parent=1 // pred_check
      _
    $region63: #{tpu_custom_call.1} parent=1 // pred_check_branch
      %94 = sbr.rel (0) target = $region65
    $region64: #{tpu_custom_call.1} parent=1 // pred_region
      %95 = dma.done [#allocation8], 512
    $region65: #{tpu_custom_call.1} parent=1 // pred_fallthru
      _
    %v97 = vld [vmem:[#allocation2] sm:$0xff]
    %v98 = vld [vmem:[#allocation2 + $0x8] sm:$0xff]
    %v99 = vld [vmem:[%s2] sm:$0xf]
    %v100 = vld [vmem:[%s2 + $0x4] sm:$0xf]
    %v101 = vld [vmem:[%s2 + $0x8] sm:$0xf]
    %v102 = vld [vmem:[%s2 + $0xc] sm:$0xf]
    %v103 = vld [vmem:[%s2 + $0x10] sm:$0xf]
    %v104 = vld [vmem:[%s2 + $0x14] sm:$0xf]
    %v105 = vld [vmem:[%s2 + $0x18] sm:$0xf]
    %v106 = vld [vmem:[%s2 + $0x1c] sm:$0xf]
    %v107 = vld [vmem:[%s2 + $0x20] sm:$0xf]
    %v108 = vld [vmem:[%s2 + $0x24] sm:$0xf]
    %v109 = vld [vmem:[%s2 + $0x28] sm:$0xf]
    %v110 = vld [vmem:[%s2 + $0x2c] sm:$0xf]
    %v111 = vld [vmem:[%s2 + $0x30] sm:$0xf]
    %v112 = vld [vmem:[%s2 + $0x34] sm:$0xf]
    %v113 = vld [vmem:[%s2 + $0x38] sm:$0xf]
    %v114 = vld [vmem:[%s2 + $0x3c] sm:$0xf]
    %v115 = vld [vmem:[%s2 + $0x40] sm:$0xf]
    %v116 = vld [vmem:[%s2 + $0x44] sm:$0xf]
    %v117 = vld [vmem:[%s2 + $0x48] sm:$0xf]
    %v118 = vld [vmem:[%s2 + $0x4c] sm:$0xf]
    %v119 = vld [vmem:[%s2 + $0x50] sm:$0xf]
    %v120 = vld [vmem:[#allocation7] ss:$0 sm:$0xff]
    %v123 = vunpack.c.l.b16 %v97
    %v124 = vunpack.c.h.b16 %v97
    %v125 = vunpack.c.l.b16 %v98
    %v126 = vunpack.c.h.b16 %v98
    %v127 = vpack.c.b16 %v125, %v123
    %v128 = vpack.c.b16 %v126, %v124
    %v151 = vunpack.c.l.b16 %v99
    %v152 = vunpack.c.l.b16 %v100
    %v153 = vunpack.c.l.b16 %v101
    %v154 = vunpack.c.l.b16 %v102
    %v155 = vunpack.c.l.b16 %v103
    %v156 = vunpack.c.l.b16 %v104
    %v157 = vunpack.c.l.b16 %v105
    %v158 = vunpack.c.l.b16 %v106
    %v159 = vunpack.c.l.b16 %v107
    %v160 = vunpack.c.l.b16 %v108
    %v161 = vunpack.c.l.b16 %v109
    %v162 = vunpack.c.l.b16 %v110
    %v163 = vunpack.c.l.b16 %v111
    %v164 = vunpack.c.l.b16 %v112
    %v165 = vunpack.c.l.b16 %v113
    %v166 = vunpack.c.l.b16 %v114
    %v167 = vunpack.c.l.b16 %v115
    %v168 = vunpack.c.l.b16 %v116
    %v169 = vunpack.c.l.b16 %v117
    %v170 = vunpack.c.l.b16 %v118
    %v171 = vunpack.c.l.b16 %v119
    %v172 = vpack.c.b16 %v152, %v151
    %v173 = vpack.c.b16 %v154, %v153
    %v174 = vpack.c.b16 %v156, %v155
    %v175 = vpack.c.b16 %v158, %v157
    %v176 = vpack.c.b16 %v160, %v159
    %v177 = vpack.c.b16 %v162, %v161
    %v178 = vpack.c.b16 %v164, %v163
    %v179 = vpack.c.b16 %v166, %v165
    %v180 = vpack.c.b16 %v168, %v167
    %v181 = vpack.c.b16 %v170, %v169
    %v182 = vpack.c.b16 %v171, %v171
    %vm193 = vcmask 318464
    %v195 = vsel %vm193, %v128, 0
    %vm197 = vcmask 1042432
    %vm198 = vcmask 1043456
    %v199 = vsel %vm197, 4294967295, 65535
    %v200 = vsel %vm198, %v199, 0
    %v202 = vand.u32 %v182, %v200
    %204 = vmatprep.subr.bf16.mxu0 0
    %205 = vmatpush1.bf16.msra.mxu0 %v172
    %206 = vmatprep.subr.bf16.mxu0 0
    %207 = vmatpush1.bf16.msra.mxu0 %v173
    %208 = vmatprep.subr.bf16.mxu0 0
    %209 = vmatpush1.bf16.msra.mxu0 %v174
    %210 = vmatprep.subr.bf16.mxu0 0
    %211 = vmatpush1.bf16.msra.mxu0 %v175
    %212 = vmatprep.subr.bf16.mxu0 0
    %213 = vmatpush1.bf16.msra.mxu0 %v176
    %214 = vmatprep.subr.bf16.mxu0 0
    %215 = vmatpush1.bf16.msra.mxu0 %v177
    %216 = vmatprep.subr.bf16.mxu0 0
    %217 = vmatpush1.bf16.msra.mxu0 %v178
    %218 = vmatprep.subr.bf16.mxu0 0
    %219 = vmatpush1.bf16.msra.mxu0 %v179
    %220 = vmatprep.subr.bf16.mxu0 0
    %221 = vmatpush1.bf16.msra.mxu0 %v180
    %222 = vmatprep.subr.bf16.mxu0 0
    %223 = vmatpush1.bf16.msra.mxu0 %v181
    %224 = vmatprep.subr.bf16.mxu0 0
    %225 = vmatpush1.bf16.msra.mxu0 %v202
    %226 = vmatprep.subr.bf16.mxu0 0
    %227 = vmatpush1.bf16.msra.mxu0 0
    %228 = vmatprep.subr.bf16.mxu0 0
    %229 = vmatpush1.bf16.msra.mxu0 0
    %230 = vmatprep.subr.bf16.mxu0 0
    %231 = vmatpush1.bf16.msra.mxu0 0
    %232 = vmatprep.subr.bf16.mxu0 0
    %233 = vmatpush1.bf16.msra.mxu0 0
    %234 = vmatprep.subr.bf16.mxu0 0
    %235 = vmatpush1.bf16.msra.mxu0 0
    %236 = vmatprep.mubr.bf16.mxu0 %v195
    %237 = vmatmul.mubr.bf16.gmra.mrb[0].mxu0 %v127
    %v238 = vpop.f32.mrb[0].mxu0
    %v239 = vadd.f32 %v120, %v238
    %v240 = vpop.f32.mrb[0].mxu0
    %v241 = vpop.f32.mrb[0].mxu0
    %v242 = vadd.f32 %v120, %v241
    %v243 = vpop.f32.mrb[0].mxu0
    %244 = vdwg.mxu0
    %v245 = vmax.f32 %v239, 0.0
    %v246 = vmax.f32 %v242, 0.0
    %v247 = vpack.c.bf16 %v246, %v245
    %v248 = vld [vmem:[%s3] sm:$0xf]
    %v249 = vld [vmem:[%s3 + $0x4] sm:$0xf]
    %v250 = vld [vmem:[%s3 + $0x8] sm:$0xf]
    %v251 = vld [vmem:[%s3 + $0xc] sm:$0xf]
    %v252 = vld [vmem:[#allocation7 + $0x1] ss:$0 sm:$0xff]
    %v257 = vunpack.c.l.b16 %v248
    %v258 = vunpack.c.l.b16 %v249
    %v259 = vunpack.c.l.b16 %v250
    %v260 = vunpack.c.l.b16 %v251
    %v261 = vpack.c.b16 %v258, %v257
    %v262 = vpack.c.b16 %v260, %v259
    %vm265 = vcmask 261120
    %v267 = vsel %vm265, %v247, 0
    %269 = vmatprep.subr.bf16.mxu0 0
    %270 = vmatpush1.bf16.msra.mxu0 %v261
    %271 = vmatprep.subr.bf16.mxu0 0
    %272 = vmatpush1.bf16.msra.mxu0 %v262
    %273 = vmatprep.subr.bf16.mxu0 0
    %274 = vmatpush1.bf16.msra.mxu0 0
    %275 = vmatprep.subr.bf16.mxu0 0
    %276 = vmatpush1.bf16.msra.mxu0 0
    %277 = vmatprep.subr.bf16.mxu0 0
    %278 = vmatpush1.bf16.msra.mxu0 0
    %279 = vmatprep.subr.bf16.mxu0 0
    %280 = vmatpush1.bf16.msra.mxu0 0
    %281 = vmatprep.subr.bf16.mxu0 0
    %282 = vmatpush1.bf16.msra.mxu0 0
    %283 = vmatprep.subr.bf16.mxu0 0
    %284 = vmatpush1.bf16.msra.mxu0 0
    %285 = vmatprep.subr.bf16.mxu0 0
    %286 = vmatpush1.bf16.msra.mxu0 0
    %287 = vmatprep.subr.bf16.mxu0 0
    %288 = vmatpush1.bf16.msra.mxu0 0
    %289 = vmatprep.subr.bf16.mxu0 0
    %290 = vmatpush1.bf16.msra.mxu0 0
    %291 = vmatprep.subr.bf16.mxu0 0
    %292 = vmatpush1.bf16.msra.mxu0 0
    %293 = vmatprep.subr.bf16.mxu0 0
    %294 = vmatpush1.bf16.msra.mxu0 0
    %295 = vmatprep.subr.bf16.mxu0 0
    %296 = vmatpush1.bf16.msra.mxu0 0
    %297 = vmatprep.subr.bf16.mxu0 0
    %298 = vmatpush1.bf16.msra.mxu0 0
    %299 = vmatprep.subr.bf16.mxu0 0
    %300 = vmatpush1.bf16.msra.mxu0 0
    %301 = vmatprep.mubr.bf16.mxu0 0
    %302 = vmatmul.mubr.bf16.gmra.mrb[0].mxu0 %v267
    %v303 = vpop.f32.mrb[0].mxu0
    %v304 = vadd.f32 %v252, %v303
    %v305 = vpop.f32.mrb[0].mxu0
    %v306 = vpop.f32.mrb[0].mxu0
    %v307 = vadd.f32 %v252, %v306
    %v308 = vpop.f32.mrb[0].mxu0
    %309 = vdwg.mxu0
    %v310 = vmax.f32 %v304, 0.0
    %v311 = vmax.f32 %v307, 0.0
    %v312 = vpack.c.bf16 %v311, %v310
    %v313 = vld [vmem:[#allocation4] sm:$0xf]
    %v314 = vld [vmem:[#allocation4 + $0x4] sm:$0xf]
    %v315 = vld [vmem:[#allocation7 + $0x2] ss:$0 sm:$0xff]
    %v318 = vunpack.c.l.b16 %v313
    %v319 = vunpack.c.l.b16 %v314
    %v320 = vpack.c.b16 %v319, %v318
    %vm322 = vcmask 130048
    %v324 = vsel %vm322, %v312, 0
    %326 = vmatprep.subr.bf16.mxu0 0
    %327 = vmatpush1.bf16.msra.mxu0 %v320
    %328 = vmatprep.subr.bf16.mxu0 0
    %329 = vmatpush1.bf16.msra.mxu0 0
    %330 = vmatprep.subr.bf16.mxu0 0
    %331 = vmatpush1.bf16.msra.mxu0 0
    %332 = vmatprep.subr.bf16.mxu0 0
    %333 = vmatpush1.bf16.msra.mxu0 0
    %334 = vmatprep.subr.bf16.mxu0 0
    %335 = vmatpush1.bf16.msra.mxu0 0
    %336 = vmatprep.subr.bf16.mxu0 0
    %337 = vmatpush1.bf16.msra.mxu0 0
    %338 = vmatprep.subr.bf16.mxu0 0
    %339 = vmatpush1.bf16.msra.mxu0 0
    %340 = vmatprep.subr.bf16.mxu0 0
    %341 = vmatpush1.bf16.msra.mxu0 0
    %342 = vmatprep.subr.bf16.mxu0 0
    %343 = vmatpush1.bf16.msra.mxu0 0
    %344 = vmatprep.subr.bf16.mxu0 0
    %345 = vmatpush1.bf16.msra.mxu0 0
    %346 = vmatprep.subr.bf16.mxu0 0
    %347 = vmatpush1.bf16.msra.mxu0 0
    %348 = vmatprep.subr.bf16.mxu0 0
    %349 = vmatpush1.bf16.msra.mxu0 0
    %350 = vmatprep.subr.bf16.mxu0 0
    %351 = vmatpush1.bf16.msra.mxu0 0
    %352 = vmatprep.subr.bf16.mxu0 0
    %353 = vmatpush1.bf16.msra.mxu0 0
    %354 = vmatprep.subr.bf16.mxu0 0
    %355 = vmatpush1.bf16.msra.mxu0 0
    %356 = vmatprep.subr.bf16.mxu0 0
    %357 = vmatpush1.bf16.msra.mxu0 0
    %358 = vmatprep.mubr.bf16.mxu0 0
    %359 = vmatmul.mubr.bf16.gmra.mrb[0].mxu0 %v324
    %v360 = vpop.f32.mrb[0].mxu0
    %v361 = vadd.f32 %v315, %v360
    %v362 = vpop.f32.mrb[0].mxu0
    %v363 = vpop.f32.mrb[0].mxu0
    %v364 = vadd.f32 %v315, %v363
    %v365 = vpop.f32.mrb[0].mxu0
    %366 = vdwg.mxu0
    %v367 = vld [vmem:[%s1] sm:$0xf]
    %v368 = vld [vmem:[%s5] sm:$0xff]
    %v369 = vld [vmem:[%s5 + $0x8] sm:$0xff]
    %v370 = vld [vmem:[%s5 + $0x10] sm:$0xff]
    %v371 = vld [vmem:[%s5 + $0x18] sm:$0xff]
    %s372 = scalar_lea.vmem [#allocation7], 3
    %v373 = vld [vmem:[%s372] ss:$8 sm:$0x3]
    %v375 = vlaneseq
    %v376 = vshrl.u32 %v375, 7
    %v377 = vsub.s32 0, %v376
    %v378 = vrot.slane %v373, %v377
    %v379 = vlaneseq
    %v380 = vshrl.u32 %v379, 7
    %v381 = vsub.s32 1, %v380
    %v382 = vrot.slane %v373, %v381
    %v389 = vunpack.c.l.b16 %v368
    %v390 = vunpack.c.h.b16 %v368
    %v391 = vunpack.c.l.b16 %v369
    %v392 = vunpack.c.h.b16 %v369
    %v393 = vunpack.c.l.b16 %v370
    %v394 = vunpack.c.h.b16 %v370
    %v395 = vunpack.c.l.b16 %v371
    %v396 = vunpack.c.h.b16 %v371
    %v397 = vpack.c.b16 %v391, %v389
    %v398 = vpack.c.b16 %v392, %v390
    %v399 = vpack.c.b16 %v395, %v393
    %v400 = vpack.c.b16 %v396, %v394
    %v406 = vsel %vm265, %v367, 0
    %408 = vmatprep.subr.bf16.mxu0 %v398
    %409 = vmatpush1.bf16.msra.mxu0 %v397
    %410 = vmatprep.subr.bf16.mxu0 %v400
    %411 = vmatpush1.bf16.msra.mxu0 %v399
    %412 = vmatprep.subr.bf16.mxu0 0
    %413 = vmatpush1.bf16.msra.mxu0 0
    %414 = vmatprep.subr.bf16.mxu0 0
    %415 = vmatpush1.bf16.msra.mxu0 0
    %416 = vmatprep.subr.bf16.mxu0 0
    %417 = vmatpush1.bf16.msra.mxu0 0
    %418 = vmatprep.subr.bf16.mxu0 0
    %419 = vmatpush1.bf16.msra.mxu0 0
    %420 = vmatprep.subr.bf16.mxu0 0
    %421 = vmatpush1.bf16.msra.mxu0 0
    %422 = vmatprep.subr.bf16.mxu0 0
    %423 = vmatpush1.bf16.msra.mxu0 0
    %424 = vmatprep.subr.bf16.mxu0 0
    %425 = vmatpush1.bf16.msra.mxu0 0
    %426 = vmatprep.subr.bf16.mxu0 0
    %427 = vmatpush1.bf16.msra.mxu0 0
    %428 = vmatprep.subr.bf16.mxu0 0
    %429 = vmatpush1.bf16.msra.mxu0 0
    %430 = vmatprep.subr.bf16.mxu0 0
    %431 = vmatpush1.bf16.msra.mxu0 0
    %432 = vmatprep.subr.bf16.mxu0 0
    %433 = vmatpush1.bf16.msra.mxu0 0
    %434 = vmatprep.subr.bf16.mxu0 0
    %435 = vmatpush1.bf16.msra.mxu0 0
    %436 = vmatprep.subr.bf16.mxu0 0
    %437 = vmatpush1.bf16.msra.mxu0 0
    %438 = vmatprep.subr.bf16.mxu0 0
    %439 = vmatpush1.bf16.msra.mxu0 0
    %440 = vmatprep.mubr.bf16.mxu0 0
    %441 = vmatmul.mubr.bf16.gmra.mrb[0].mxu0 %v406
    %v442 = vpop.f32.mrb[0].mxu0
    %v443 = vadd.f32 %v378, %v442
    %v444 = vpop.f32.mrb[0].mxu0
    %v445 = vadd.f32 %v382, %v444
    %v446 = vpop.f32.mrb[0].mxu0
    %v447 = vpop.f32.mrb[0].mxu0
    %448 = vdwg.mxu0
    %v449 = vmax.f32 %v443, 0.0
    %v450 = vmax.f32 %v445, 0.0
    %v451 = vpack.c.bf16 %v449, %v449
    %v452 = vpack.c.bf16 %v450, %v450
    %v453 = vld [vmem:[%s6] sm:$0xf]
    %v454 = vld [vmem:[%s6 + $0x4] sm:$0xf]
    %v455 = vld [vmem:[%s6 + $0x8] sm:$0xf]
    %v456 = vld [vmem:[%s6 + $0xc] sm:$0xf]
    %v457 = vld [vmem:[%s6 + $0x10] sm:$0xf]
    %v458 = vld [vmem:[%s6 + $0x14] sm:$0xf]
    %v459 = vld [vmem:[%s6 + $0x18] sm:$0xf]
    %v460 = vld [vmem:[%s6 + $0x1c] sm:$0xf]
    %v461 = vld [vmem:[%s6 + $0x20] sm:$0xf]
    %v462 = vld [vmem:[%s6 + $0x24] sm:$0xf]
    %v463 = vld [vmem:[%s6 + $0x28] sm:$0xf]
    %v464 = vld [vmem:[%s6 + $0x2c] sm:$0xf]
    %v465 = vld [vmem:[%s6 + $0x30] sm:$0xf]
    %v466 = vld [vmem:[%s6 + $0x34] sm:$0xf]
    %v467 = vld [vmem:[%s6 + $0x38] sm:$0xf]
    %v468 = vld [vmem:[%s6 + $0x3c] sm:$0xf]
    %v469 = vld [vmem:[%s6 + $0x40] sm:$0xf]
    %v470 = vld [vmem:[%s6 + $0x44] sm:$0xf]
    %v471 = vld [vmem:[%s6 + $0x48] sm:$0xf]
    %v472 = vld [vmem:[%s6 + $0x4c] sm:$0xf]
    %v473 = vld [vmem:[%s6 + $0x50] sm:$0xf]
    %v474 = vld [vmem:[%s6 + $0x54] sm:$0xf]
    %v475 = vld [vmem:[%s6 + $0x58] sm:$0xf]
    %v476 = vld [vmem:[%s6 + $0x5c] sm:$0xf]
    %v477 = vld [vmem:[%s6 + $0x60] sm:$0xf]
    %v478 = vld [vmem:[%s6 + $0x64] sm:$0xf]
    %v479 = vld [vmem:[%s6 + $0x68] sm:$0xf]
    %v480 = vld [vmem:[%s6 + $0x6c] sm:$0xf]
    %v481 = vld [vmem:[%s6 + $0x70] sm:$0xf]
    %v482 = vld [vmem:[%s6 + $0x74] sm:$0xf]
    %v483 = vld [vmem:[%s6 + $0x78] sm:$0xf]
    %v484 = vld [vmem:[%s6 + $0x7c] sm:$0xf]
    %v485 = vld [vmem:[#allocation7 + $0x4] ss:$0 sm:$0xff]
    %v518 = vunpack.c.l.b16 %v453
    %v519 = vunpack.c.l.b16 %v454
    %v520 = vunpack.c.l.b16 %v455
    %v521 = vunpack.c.l.b16 %v456
    %v522 = vunpack.c.l.b16 %v457
    %v523 = vunpack.c.l.b16 %v458
    %v524 = vunpack.c.l.b16 %v459
    %v525 = vunpack.c.l.b16 %v460
    %v526 = vunpack.c.l.b16 %v461
    %v527 = vunpack.c.l.b16 %v462
    %v528 = vunpack.c.l.b16 %v463
    %v529 = vunpack.c.l.b16 %v464
    %v530 = vunpack.c.l.b16 %v465
    %v531 = vunpack.c.l.b16 %v466
    %v532 = vunpack.c.l.b16 %v467
    %v533 = vunpack.c.l.b16 %v468
    %v534 = vunpack.c.l.b16 %v469
    %v535 = vunpack.c.l.b16 %v470
    %v536 = vunpack.c.l.b16 %v471
    %v537 = vunpack.c.l.b16 %v472
    %v538 = vunpack.c.l.b16 %v473
    %v539 = vunpack.c.l.b16 %v474
    %v540 = vunpack.c.l.b16 %v475
    %v541 = vunpack.c.l.b16 %v476
    %v542 = vunpack.c.l.b16 %v477
    %v543 = vunpack.c.l.b16 %v478
    %v544 = vunpack.c.l.b16 %v479
    %v545 = vunpack.c.l.b16 %v480
    %v546 = vunpack.c.l.b16 %v481
    %v547 = vunpack.c.l.b16 %v482
    %v548 = vunpack.c.l.b16 %v483
    %v549 = vunpack.c.l.b16 %v484
    %v550 = vpack.c.b16 %v519, %v518
    %v551 = vpack.c.b16 %v521, %v520
    %v552 = vpack.c.b16 %v523, %v522
    %v553 = vpack.c.b16 %v525, %v524
    %v554 = vpack.c.b16 %v527, %v526
    %v555 = vpack.c.b16 %v529, %v528
    %v556 = vpack.c.b16 %v531, %v530
    %v557 = vpack.c.b16 %v533, %v532
    %v558 = vpack.c.b16 %v535, %v534
    %v559 = vpack.c.b16 %v537, %v536
    %v560 = vpack.c.b16 %v539, %v538
    %v561 = vpack.c.b16 %v541, %v540
    %v562 = vpack.c.b16 %v543, %v542
    %v563 = vpack.c.b16 %v545, %v544
    %v564 = vpack.c.b16 %v547, %v546
    %v565 = vpack.c.b16 %v549, %v548
    %582 = vmatprep.subr.bf16.mxu0 0
    %583 = vmatpush1.bf16.msra.mxu0 %v550
    %584 = vmatprep.subr.bf16.mxu0 0
    %585 = vmatpush1.bf16.msra.mxu0 %v551
    %586 = vmatprep.subr.bf16.mxu0 0
    %587 = vmatpush1.bf16.msra.mxu0 %v552
    %588 = vmatprep.subr.bf16.mxu0 0
    %589 = vmatpush1.bf16.msra.mxu0 %v553
    %590 = vmatprep.subr.bf16.mxu0 0
    %591 = vmatpush1.bf16.msra.mxu0 %v554
    %592 = vmatprep.subr.bf16.mxu0 0
    %593 = vmatpush1.bf16.msra.mxu0 %v555
    %594 = vmatprep.subr.bf16.mxu0 0
    %595 = vmatpush1.bf16.msra.mxu0 %v556
    %596 = vmatprep.subr.bf16.mxu0 0
    %597 = vmatpush1.bf16.msra.mxu0 %v557
    %598 = vmatprep.subr.bf16.mxu0 0
    %599 = vmatpush1.bf16.msra.mxu0 %v558
    %600 = vmatprep.subr.bf16.mxu0 0
    %601 = vmatpush1.bf16.msra.mxu0 %v559
    %602 = vmatprep.subr.bf16.mxu0 0
    %603 = vmatpush1.bf16.msra.mxu0 %v560
    %604 = vmatprep.subr.bf16.mxu0 0
    %605 = vmatpush1.bf16.msra.mxu0 %v561
    %606 = vmatprep.subr.bf16.mxu0 0
    %607 = vmatpush1.bf16.msra.mxu0 %v562
    %608 = vmatprep.subr.bf16.mxu0 0
    %609 = vmatpush1.bf16.msra.mxu0 %v563
    %610 = vmatprep.subr.bf16.mxu0 0
    %611 = vmatpush1.bf16.msra.mxu0 %v564
    %612 = vmatprep.subr.bf16.mxu0 0
    %613 = vmatpush1.bf16.msra.mxu0 %v565
    %614 = vmatprep.mubr.bf16.mxu0 %v452
    %615 = vmatmul.mubr.bf16.gmra.mrb[0].mxu0 %v451
    %v616 = vpop.f32.mrb[0].mxu0
    %v617 = vadd.f32 %v485, %v616
    %v618 = vpop.f32.mrb[0].mxu0
    %v619 = vpop.f32.mrb[0].mxu0
    %v620 = vpop.f32.mrb[0].mxu0
    %621 = vdwg.mxu0
    %v622 = vmax.f32 %v617, 0.0
    %v623 = vpack.c.bf16 %v622, %v622
    %v624 = vld [vmem:[%s7] sm:$0xf]
    %v625 = vld [vmem:[%s7 + $0x4] sm:$0xf]
    %v626 = vld [vmem:[%s7 + $0x8] sm:$0xf]
    %v627 = vld [vmem:[%s7 + $0xc] sm:$0xf]
    %v628 = vld [vmem:[%s7 + $0x10] sm:$0xf]
    %v629 = vld [vmem:[%s7 + $0x14] sm:$0xf]
    %v630 = vld [vmem:[%s7 + $0x18] sm:$0xf]
    %v631 = vld [vmem:[%s7 + $0x1c] sm:$0xf]
    %v632 = vld [vmem:[%s7 + $0x20] sm:$0xf]
    %v633 = vld [vmem:[%s7 + $0x24] sm:$0xf]
    %v634 = vld [vmem:[%s7 + $0x28] sm:$0xf]
    %v635 = vld [vmem:[%s7 + $0x2c] sm:$0xf]
    %v636 = vld [vmem:[%s7 + $0x30] sm:$0xf]
    %v637 = vld [vmem:[%s7 + $0x34] sm:$0xf]
    %v638 = vld [vmem:[%s7 + $0x38] sm:$0xf]
    %v639 = vld [vmem:[%s7 + $0x3c] sm:$0xf]
    %v640 = vld [vmem:[#allocation7 + $0x5] ss:$0 sm:$0xff]
    %v657 = vunpack.c.l.b16 %v624
    %v658 = vunpack.c.l.b16 %v625
    %v659 = vunpack.c.l.b16 %v626
    %v660 = vunpack.c.l.b16 %v627
    %v661 = vunpack.c.l.b16 %v628
    %v662 = vunpack.c.l.b16 %v629
    %v663 = vunpack.c.l.b16 %v630
    %v664 = vunpack.c.l.b16 %v631
    %v665 = vunpack.c.l.b16 %v632
    %v666 = vunpack.c.l.b16 %v633
    %v667 = vunpack.c.l.b16 %v634
    %v668 = vunpack.c.l.b16 %v635
    %v669 = vunpack.c.l.b16 %v636
    %v670 = vunpack.c.l.b16 %v637
    %v671 = vunpack.c.l.b16 %v638
    %v672 = vunpack.c.l.b16 %v639
    %v673 = vpack.c.b16 %v658, %v657
    %v674 = vpack.c.b16 %v660, %v659
    %v675 = vpack.c.b16 %v662, %v661
    %v676 = vpack.c.b16 %v664, %v663
    %v677 = vpack.c.b16 %v666, %v665
    %v678 = vpack.c.b16 %v668, %v667
    %v679 = vpack.c.b16 %v670, %v669
    %v680 = vpack.c.b16 %v672, %v671
    %689 = vmatprep.subr.bf16.mxu0 0
    %690 = vmatpush1.bf16.msra.mxu0 %v673
    %691 = vmatprep.subr.bf16.mxu0 0
    %692 = vmatpush1.bf16.msra.mxu0 %v674
    %693 = vmatprep.subr.bf16.mxu0 0
    %694 = vmatpush1.bf16.msra.mxu0 %v675
    %695 = vmatprep.subr.bf16.mxu0 0
    %696 = vmatpush1.bf16.msra.mxu0 %v676
    %697 = vmatprep.subr.bf16.mxu0 0
    %698 = vmatpush1.bf16.msra.mxu0 %v677
    %699 = vmatprep.subr.bf16.mxu0 0
    %700 = vmatpush1.bf16.msra.mxu0 %v678
    %701 = vmatprep.subr.bf16.mxu0 0
    %702 = vmatpush1.bf16.msra.mxu0 %v679
    %703 = vmatprep.subr.bf16.mxu0 0
    %704 = vmatpush1.bf16.msra.mxu0 %v680
    %705 = vmatprep.subr.bf16.mxu0 0
    %706 = vmatpush1.bf16.msra.mxu0 0
    %707 = vmatprep.subr.bf16.mxu0 0
    %708 = vmatpush1.bf16.msra.mxu0 0
    %709 = vmatprep.subr.bf16.mxu0 0
    %710 = vmatpush1.bf16.msra.mxu0 0
    %711 = vmatprep.subr.bf16.mxu0 0
    %712 = vmatpush1.bf16.msra.mxu0 0
    %713 = vmatprep.subr.bf16.mxu0 0
    %714 = vmatpush1.bf16.msra.mxu0 0
    %715 = vmatprep.subr.bf16.mxu0 0
    %716 = vmatpush1.bf16.msra.mxu0 0
    %717 = vmatprep.subr.bf16.mxu0 0
    %718 = vmatpush1.bf16.msra.mxu0 0
    %719 = vmatprep.subr.bf16.mxu0 0
    %720 = vmatpush1.bf16.msra.mxu0 0
    %721 = vmatprep.mubr.bf16.mxu0 0
    %722 = vmatmul.mubr.bf16.gmra.mrb[0].mxu0 %v623
    %v723 = vpop.f32.mrb[0].mxu0
    %v724 = vadd.f32 %v640, %v723
    %v725 = vpop.f32.mrb[0].mxu0
    %v726 = vpop.f32.mrb[0].mxu0
    %v727 = vpop.f32.mrb[0].mxu0
    %728 = vdwg.mxu0
    %v729 = vpack.c.bf16 %v361, %v361
    %v730 = vld [vmem:[%s8] sm:$0xf]
    %v731 = vld [vmem:[%s8 + $0x4] sm:$0xf]
    %v732 = vld [vmem:[%s8 + $0x8] sm:$0xf]
    %v733 = vld [vmem:[%s8 + $0xc] sm:$0xf]
    %v734 = vld [vmem:[%s8 + $0x10] sm:$0xf]
    %v735 = vld [vmem:[%s8 + $0x14] sm:$0xf]
    %v736 = vld [vmem:[%s8 + $0x18] sm:$0xf]
    %v737 = vld [vmem:[%s8 + $0x1c] sm:$0xf]
    %v738 = vpack.c.bf16 %v364, %v364
    %v739 = vld [vmem:[%s9] sm:$0xf]
    %v740 = vld [vmem:[%s9 + $0x4] sm:$0xf]
    %v741 = vld [vmem:[%s9 + $0x8] sm:$0xf]
    %v742 = vld [vmem:[%s9 + $0xc] sm:$0xf]
    %v743 = vld [vmem:[%s9 + $0x10] sm:$0xf]
    %v744 = vld [vmem:[%s9 + $0x14] sm:$0xf]
    %v745 = vld [vmem:[%s9 + $0x18] sm:$0xf]
    %v746 = vld [vmem:[%s9 + $0x1c] sm:$0xf]
    %v755 = vunpack.c.l.b16 %v739
    %v756 = vunpack.c.l.b16 %v740
    %v757 = vunpack.c.l.b16 %v741
    %v758 = vunpack.c.l.b16 %v742
    %v759 = vunpack.c.l.b16 %v743
    %v760 = vunpack.c.l.b16 %v744
    %v761 = vunpack.c.l.b16 %v745
    %v762 = vunpack.c.l.b16 %v746
    %v763 = vpack.c.b16 %v756, %v755
    %v764 = vpack.c.b16 %v758, %v757
    %v765 = vpack.c.b16 %v760, %v759
    %v766 = vpack.c.b16 %v762, %v761
    %vm771 = vcmask 523264
    %v773 = vsel %vm771, %v738, 0
    %775 = vmatprep.subr.bf16.mxu0 0
    %776 = vmatpush1.bf16.msra.mxu0 %v763
    %777 = vmatprep.subr.bf16.mxu0 0
    %778 = vmatpush1.bf16.msra.mxu0 %v764
    %779 = vmatprep.subr.bf16.mxu0 0
    %780 = vmatpush1.bf16.msra.mxu0 %v765
    %781 = vmatprep.subr.bf16.mxu0 0
    %782 = vmatpush1.bf16.msra.mxu0 %v766
    %783 = vmatprep.subr.bf16.mxu0 0
    %784 = vmatpush1.bf16.msra.mxu0 0
    %785 = vmatprep.subr.bf16.mxu0 0
    %786 = vmatpush1.bf16.msra.mxu0 0
    %787 = vmatprep.subr.bf16.mxu0 0
    %788 = vmatpush1.bf16.msra.mxu0 0
    %789 = vmatprep.subr.bf16.mxu0 0
    %790 = vmatpush1.bf16.msra.mxu0 0
    %791 = vmatprep.subr.bf16.mxu0 0
    %792 = vmatpush1.bf16.msra.mxu0 0
    %793 = vmatprep.subr.bf16.mxu0 0
    %794 = vmatpush1.bf16.msra.mxu0 0
    %795 = vmatprep.subr.bf16.mxu0 0
    %796 = vmatpush1.bf16.msra.mxu0 0
    %797 = vmatprep.subr.bf16.mxu0 0
    %798 = vmatpush1.bf16.msra.mxu0 0
    %799 = vmatprep.subr.bf16.mxu0 0
    %800 = vmatpush1.bf16.msra.mxu0 0
    %801 = vmatprep.subr.bf16.mxu0 0
    %802 = vmatpush1.bf16.msra.mxu0 0
    %803 = vmatprep.subr.bf16.mxu0 0
    %804 = vmatpush1.bf16.msra.mxu0 0
    %805 = vmatprep.subr.bf16.mxu0 0
    %806 = vmatpush1.bf16.msra.mxu0 0
    %807 = vmatprep.mubr.bf16.mxu0 0
    %808 = vmatmul.mubr.bf16.gmra.mrb[0].mxu0 %v773
    %v809 = vpop.f32.mrb[0].mxu0
    %v810 = vadd.f32 0.0, %v809
    %v811 = vpop.f32.mrb[0].mxu0
    %v812 = vpop.f32.mrb[0].mxu0
    %v813 = vpop.f32.mrb[0].mxu0
    %814 = vdwg.mxu0
    %v823 = vunpack.c.l.b16 %v730
    %v824 = vunpack.c.l.b16 %v731
    %v825 = vunpack.c.l.b16 %v732
    %v826 = vunpack.c.l.b16 %v733
    %v827 = vunpack.c.l.b16 %v734
    %v828 = vunpack.c.l.b16 %v735
    %v829 = vunpack.c.l.b16 %v736
    %v830 = vunpack.c.l.b16 %v737
    %v831 = vpack.c.b16 %v824, %v823
    %v832 = vpack.c.b16 %v826, %v825
    %v833 = vpack.c.b16 %v828, %v827
    %v834 = vpack.c.b16 %v830, %v829
    %v840 = vsel %vm771, %v729, 0
    %842 = vmatprep.subr.bf16.mxu0 0
    %843 = vmatpush1.bf16.msra.mxu0 %v831
    %844 = vmatprep.subr.bf16.mxu0 0
    %845 = vmatpush1.bf16.msra.mxu0 %v832
    %846 = vmatprep.subr.bf16.mxu0 0
    %847 = vmatpush1.bf16.msra.mxu0 %v833
    %848 = vmatprep.subr.bf16.mxu0 0
    %849 = vmatpush1.bf16.msra.mxu0 %v834
    %850 = vmatprep.subr.bf16.mxu0 0
    %851 = vmatpush1.bf16.msra.mxu0 0
    %852 = vmatprep.subr.bf16.mxu0 0
    %853 = vmatpush1.bf16.msra.mxu0 0
    %854 = vmatprep.subr.bf16.mxu0 0
    %855 = vmatpush1.bf16.msra.mxu0 0
    %856 = vmatprep.subr.bf16.mxu0 0
    %857 = vmatpush1.bf16.msra.mxu0 0
    %858 = vmatprep.subr.bf16.mxu0 0
    %859 = vmatpush1.bf16.msra.mxu0 0
    %860 = vmatprep.subr.bf16.mxu0 0
    %861 = vmatpush1.bf16.msra.mxu0 0
    %862 = vmatprep.subr.bf16.mxu0 0
    %863 = vmatpush1.bf16.msra.mxu0 0
    %864 = vmatprep.subr.bf16.mxu0 0
    %865 = vmatpush1.bf16.msra.mxu0 0
    %866 = vmatprep.subr.bf16.mxu0 0
    %867 = vmatpush1.bf16.msra.mxu0 0
    %868 = vmatprep.subr.bf16.mxu0 0
    %869 = vmatpush1.bf16.msra.mxu0 0
    %870 = vmatprep.subr.bf16.mxu0 0
    %871 = vmatpush1.bf16.msra.mxu0 0
    %872 = vmatprep.subr.bf16.mxu0 0
    %873 = vmatpush1.bf16.msra.mxu0 0
    %874 = vmatprep.mubr.bf16.mxu0 0
    %875 = vmatmul.mubr.bf16.gmra.mrb[0].mxu0 %v840
    %v876 = vpop.f32.mrb[0].mxu0
    %v877 = vadd.f32 %v810, %v876
    %v878 = vpop.f32.mrb[0].mxu0
    %v879 = vpop.f32.mrb[0].mxu0
    %v880 = vpop.f32.mrb[0].mxu0
    %881 = vdwg.mxu0
    %v882 = vpack.c.bf16 %v724, %v724
    %v883 = vld [vmem:[#allocation6] sm:$0xf]
    %v884 = vld [vmem:[#allocation6 + $0x4] sm:$0xf]
    %v885 = vld [vmem:[#allocation6 + $0x8] sm:$0xf]
    %v886 = vld [vmem:[#allocation6 + $0xc] sm:$0xf]
    %v887 = vld [vmem:[#allocation6 + $0x10] sm:$0xf]
    %v888 = vld [vmem:[#allocation6 + $0x14] sm:$0xf]
    %v889 = vld [vmem:[#allocation6 + $0x18] sm:$0xf]
    %v890 = vld [vmem:[#allocation6 + $0x1c] sm:$0xf]
    %v899 = vunpack.c.l.b16 %v883
    %v900 = vunpack.c.l.b16 %v884
    %v901 = vunpack.c.l.b16 %v885
    %v902 = vunpack.c.l.b16 %v886
    %v903 = vunpack.c.l.b16 %v887
    %v904 = vunpack.c.l.b16 %v888
    %v905 = vunpack.c.l.b16 %v889
    %v906 = vunpack.c.l.b16 %v890
    %v907 = vpack.c.b16 %v900, %v899
    %v908 = vpack.c.b16 %v902, %v901
    %v909 = vpack.c.b16 %v904, %v903
    %v910 = vpack.c.b16 %v906, %v905
    %v916 = vsel %vm771, %v882, 0
    %918 = vmatprep.subr.bf16.mxu0 0
    %919 = vmatpush1.bf16.msra.mxu0 %v907
    %920 = vmatprep.subr.bf16.mxu0 0
    %921 = vmatpush1.bf16.msra.mxu0 %v908
    %922 = vmatprep.subr.bf16.mxu0 0
    %923 = vmatpush1.bf16.msra.mxu0 %v909
    %924 = vmatprep.subr.bf16.mxu0 0
    %925 = vmatpush1.bf16.msra.mxu0 %v910
    %926 = vmatprep.subr.bf16.mxu0 0
    %927 = vmatpush1.bf16.msra.mxu0 0
    %928 = vmatprep.subr.bf16.mxu0 0
    %929 = vmatpush1.bf16.msra.mxu0 0
    %930 = vmatprep.subr.bf16.mxu0 0
    %931 = vmatpush1.bf16.msra.mxu0 0
    %932 = vmatprep.subr.bf16.mxu0 0
    %933 = vmatpush1.bf16.msra.mxu0 0
    %934 = vmatprep.subr.bf16.mxu0 0
    %935 = vmatpush1.bf16.msra.mxu0 0
    %936 = vmatprep.subr.bf16.mxu0 0
    %937 = vmatpush1.bf16.msra.mxu0 0
    %938 = vmatprep.subr.bf16.mxu0 0
    %939 = vmatpush1.bf16.msra.mxu0 0
    %940 = vmatprep.subr.bf16.mxu0 0
    %941 = vmatpush1.bf16.msra.mxu0 0
    %942 = vmatprep.subr.bf16.mxu0 0
    %943 = vmatpush1.bf16.msra.mxu0 0
    %944 = vmatprep.subr.bf16.mxu0 0
    %945 = vmatpush1.bf16.msra.mxu0 0
    %946 = vmatprep.subr.bf16.mxu0 0
    %947 = vmatpush1.bf16.msra.mxu0 0
    %948 = vmatprep.subr.bf16.mxu0 0
    %949 = vmatpush1.bf16.msra.mxu0 0
    %950 = vmatprep.mubr.bf16.mxu0 0
    %951 = vmatmul.mubr.bf16.gmra.mrb[0].mxu0 %v916
    %v952 = vpop.f32.mrb[0].mxu0
    %v953 = vadd.f32 0.0, %v952
    %v954 = vpop.f32.mrb[0].mxu0
    %v955 = vpop.f32.mrb[0].mxu0
    %v956 = vpop.f32.mrb[0].mxu0
    %957 = vdwg.mxu0
    %v958 = vadd.f32 %v877, %v953
    %v959 = vld [vmem:[#allocation7 + $0x6] ss:$0 sm:$0xff]
    %v960 = vadd.f32 %v958, %v959
    %v961 = vmax.f32 %v960, 0.0
    %v962 = vld [vmem:[#allocation7 + $0x7] ss:$0 sm:$0xff]
    %v963 = vmul.f32 %v961, %v962
    %vm964 = vcmask 785408
    %v965 = vsel %vm964, %v963, 0.0
    %966 = vadd.xlane.f32.xlu0 %v965
    %v967 = vpop.xlane.xlu0 %966
    %v968 = vld [vmem:[#allocation7 + $0x10] ss:$0 sm:$0xff]
    %v969 = vadd.f32 %v967, %v968
    %vm970 = vcmask 7168
    %971 = vst.msk [vmem:[%s12] sm:$0xff] %vm970, %v969
    // Predicated region
    $region66: #{tpu_custom_call.1} parent=1 // pred_check
      _
    $region67: #{tpu_custom_call.1} parent=1 // pred_check_branch
      %973 = sbr.rel (0) target = $region69
    $region68: #{tpu_custom_call.1} parent=1 // pred_region
      _
    $region69: #{tpu_custom_call.1} parent=1 // pred_fallthru
      _
    // Predicated region
    $region70: #{tpu_custom_call.1} parent=1 // pred_check
      _
    $region71: #{tpu_custom_call.1} parent=1 // pred_check_branch
      %975 = sbr.rel (0) target = $region73
    $region72: #{tpu_custom_call.1} parent=1 // pred_region
      _
    $region73: #{tpu_custom_call.1} parent=1 // pred_fallthru
      _
    %976 = vsyncpa [#allocation3], 1
    %977 = vsyncpa [#allocation5], 1
    %978 = vsyncpa [#allocation8], 1

</llo_original>
